<compile_context>
chip_gen: v5e
topology: v5e:2x2
jax: 0.10.0
libtpu: 0.0.40
codegen_flags: <defaults>
</compile_context>

<pallas_src>
import functools

import jax
import jax.numpy as jnp
from jax import lax
from jax.experimental import pallas as pl
from jax.experimental.pallas import tpu as pltpu


# Clamp on squared norms -> effective per-norm clamp of ~1e-8 (torch default eps).
_EPS_SQ = 1e-16


def _finalize(dot, n1, n2, out_dtype):
    inv1 = lax.rsqrt(jnp.maximum(n1, jnp.float32(_EPS_SQ)))
    inv2 = lax.rsqrt(jnp.maximum(n2, jnp.float32(_EPS_SQ)))
    return (dot * inv1 * inv2).astype(out_dtype)


def _cosine_fused_kernel(f1_ref, f2_ref, o_ref, *, native_mul):
    # Whole channel extent in one block: no reduction axis, no scratch.
    f1 = f1_ref[...]            # (1, C, lane)
    f2 = f2_ref[...]
    if not native_mul:
        f1 = f1.astype(jnp.float32)
        f2 = f2.astype(jnp.float32)
    dot = jnp.sum((f1 * f2).astype(jnp.float32), axis=1)   # (1, lane), f32 accumulate
    n1 = jnp.sum((f1 * f1).astype(jnp.float32), axis=1)
    n2 = jnp.sum((f2 * f2).astype(jnp.float32), axis=1)
    o_ref[0] = _finalize(dot, n1, n2, o_ref.dtype)


def _cosine_reduce_kernel(f1_ref, f2_ref, o_ref, dot_acc, n1_acc, n2_acc, *,
                          native_mul):
    # Channel axis tiled: f32 accumulators persist across the (arbitrary) k axis.
    k = pl.program_id(2)

    @pl.when(k == 0)
    def _init():
        dot_acc[...] = jnp.zeros_like(dot_acc)
        n1_acc[...] = jnp.zeros_like(n1_acc)
        n2_acc[...] = jnp.zeros_like(n2_acc)

    f1 = f1_ref[...]            # (1, c_tile, lane)
    f2 = f2_ref[...]
    if not native_mul:
        f1 = f1.astype(jnp.float32)
        f2 = f2.astype(jnp.float32)
    dot_acc[...] += jnp.sum((f1 * f2).astype(jnp.float32), axis=1)
    n1_acc[...] += jnp.sum((f1 * f1).astype(jnp.float32), axis=1)
    n2_acc[...] += jnp.sum((f2 * f2).astype(jnp.float32), axis=1)

    @pl.when(k == pl.num_programs(2) - 1)
    def _fin():
        o_ref[0] = _finalize(dot_acc[...], n1_acc[...], n2_acc[...], o_ref.dtype)


def _dtype_sublane_align(dtype):
    # Sub-32-bit dtypes pack along sublanes -> align channel tile accordingly.
    return {4: 8, 2: 16, 1: 32}.get(jnp.dtype(dtype).itemsize, 8)


def _pick_channel_tile(c, cap, align):
    """Largest `align`-multiple divisor of c that is <= cap; full c if c <= cap."""
    if c <= cap:
        return c
    start = cap - (cap % align)
    for ct in range(start, align - 1, -align):
        if c % ct == 0:
            return ct
    return c  # no aligned divisor: whole C in one block (kc == 1 fused path)


def _pick_lane(hw, lane_tile, want_min_blocks):
    """Largest 128-multiple divisor of round128(hw) that is <= lane_tile.

    If `want_min_blocks` > 1 (batch==1), prefer >= that many spatial blocks so
    v7x's two TensorCores both get work.
    """
    m = pl.cdiv(hw, 128)  # spatial extent in 128-lane units
    best = 1
    for d in range(1, m + 1):
        if m % d == 0 and 128 * d <= lane_tile:
            best = d
    if want_min_blocks > 1 and best == m and m > 1:
        cap = (m + want_min_blocks - 1) // want_min_blocks
        best = 1
        for d in range(1, cap + 1):
            if m % d == 0 and 128 * d <= lane_tile:
                best = d
    return 128 * best


def evaluator_forward(feats1, feats2, *, lane_tile=1024, max_channel_block=256):
    """Concrete Evaluator.forward: per-pixel cosine similarity of two NCHW maps."""
    assert feats1.shape == feats2.shape, "feature maps must have the same shape"
    assert feats1.dtype == feats2.dtype, "feature maps must have the same dtype"
    n, c, h, w = feats1.shape
    hw = h * w
    out_dtype = feats1.dtype
    in_itemsize = jnp.dtype(feats1.dtype).itemsize
    out_itemsize = jnp.dtype(out_dtype).itemsize

    # 16-bit inputs: multiply in native dtype (bf16 VPU on v6e/v7x), widen only
    # at the f32 accumulate.  f32 inputs keep full f32 math.
    native_mul = in_itemsize == 2

    lane_tile = max(128, (int(lane_tile) // 128) * 128)
    lane = _pick_lane(hw, lane_tile, want_min_blocks=2 if n == 1 else 1)

    align = _dtype_sublane_align(feats1.dtype)
    c_tile = _pick_channel_tile(c, max_channel_block, align)

    # Safety valve: keep the live footprint bounded even if an awkward C forced
    # the full-C fallback (shrink the lane tile, ragged blocks stay legal).
    def _block_bytes(lane_):
        return c_tile * lane_ * (2 * 2 * in_itemsize + 2 * 4)
    while lane > 128 and _block_bytes(lane) > (24 << 20):
        lane = max(128, (lane // 2 // 128) * 128)

    kc = c // c_tile                  # c_tile is a divisor of c (or full c)
    spatial = pl.cdiv(hw, lane)       # last block may be ragged; OOB writes dropped

    f1 = feats1.reshape(n, c, hw)     # free reshape, no transpose, no padding
    f2 = feats2.reshape(n, c, hw)

    # VMEM budget: double-buffered inputs + f32 widen temporaries + output +
    # accumulators (sublane-padded), doubled for slack, capped below v7x's
    # 64 MiB physical VMEM.
    vmem_need = (2 * 2 * c_tile * lane * in_itemsize
                 + 2 * c_tile * lane * 4
                 + 2 * 8 * lane * out_itemsize
                 + 3 * 8 * lane * 4)
    vmem_limit = int(min(48 << 20, max(24 << 20, 2 * vmem_need)))

    out_shape = jax.ShapeDtypeStruct((n, 1, hw), out_dtype)

    if kc == 1:
        # Fused path: no reduction axis, no scratch, minimal per-step overhead.
        grid_spec = pltpu.PrefetchScalarGridSpec(
            num_scalar_prefetch=0,
            grid=(n, spatial),
            in_specs=[pl.BlockSpec((1, c_tile, lane), lambda b, i: (b, 0, i)),
                      pl.BlockSpec((1, c_tile, lane), lambda b, i: (b, 0, i))],
            out_specs=pl.BlockSpec((1, 1, lane), lambda b, i: (b, 0, i)),
            scratch_shapes=(),
        )
        kernel = functools.partial(_cosine_fused_kernel, native_mul=native_mul)
        dim_sem = ("parallel", "parallel")
    else:
        grid_spec = pltpu.PrefetchScalarGridSpec(
            num_scalar_prefetch=0,
            grid=(n, spatial, kc),
            in_specs=[pl.BlockSpec((1, c_tile, lane), lambda b, i, k: (b, k, i)),
                      pl.BlockSpec((1, c_tile, lane), lambda b, i, k: (b, k, i))],
            out_specs=pl.BlockSpec((1, 1, lane), lambda b, i, k: (b, 0, i)),
            scratch_shapes=[pltpu.VMEM((1, lane), jnp.float32),
                            pltpu.VMEM((1, lane), jnp.float32),
                            pltpu.VMEM((1, lane), jnp.float32)],
        )
        kernel = functools.partial(_cosine_reduce_kernel, native_mul=native_mul)
        dim_sem = ("parallel", "parallel", "arbitrary")

    out = pl.pallas_call(
        kernel,
        out_shape=out_shape,
        grid_spec=grid_spec,
        compiler_params=pltpu.CompilerParams(
            dimension_semantics=dim_sem,
            vmem_limit_bytes=vmem_limit,
        ),
    )(f1, f2)

    return out.reshape(n, h, w)


if __name__ == "__main__":
    key = jax.random.PRNGKey(0)
    k1, k2, k3, k4, k5, k6 = jax.random.split(key, 6)

    def reference(a, b):
        a32 = a.astype(jnp.float32)
        b32 = b.astype(jnp.float32)
        dot = jnp.sum(a32 * b32, axis=1)
        n1 = jnp.sum(a32 * a32, axis=1)
        n2 = jnp.sum(b32 * b32, axis=1)
        return (dot
                * lax.rsqrt(jnp.maximum(n1, jnp.float32(_EPS_SQ)))
                * lax.rsqrt(jnp.maximum(n2, jnp.float32(_EPS_SQ))))

    # 1) Small NCHW feature maps (fused single-channel-block path, f32).
    feats1 = jax.random.normal(k1, (2, 4, 16, 16), dtype=jnp.float32)
    feats2 = jax.random.normal(k2, (2, 4, 16, 16), dtype=jnp.float32)
    out = evaluator_forward(feats1, feats2)
    jax.block_until_ready(out)
    ref = reference(feats1, feats2)
    assert out.shape == (2, 16, 16)
    assert out.dtype == feats1.dtype
    assert jnp.allclose(out, ref, atol=1e-5, rtol=1e-5)

    # 2) Non-128-multiple spatial size (ragged last block, no padding pass) with
    #    bf16 inputs (native bf16 multiplies, f32 accumulate, bf16 output).
    g1 = jax.random.normal(k3, (2, 8, 7, 7), dtype=jnp.bfloat16)
    g2 = jax.random.normal(k4, (2, 8, 7, 7), dtype=jnp.bfloat16)
    out2 = evaluator_forward(g1, g2)
    jax.block_until_ready(out2)
    ref2 = reference(g1, g2)
    assert out2.shape == (2, 7, 7)
    assert out2.dtype == jnp.bfloat16
    assert jnp.allclose(out2.astype(jnp.float32), ref2, atol=2e-2, rtol=2e-2)

    # 3) Channel-tiled reduction path (kc > 1) with batch==1 (spatial split so
    #    both v7x TCs get work) and a ragged final spatial block.
    h1 = jax.random.normal(k5, (1, 64, 12, 12), dtype=jnp.float32)
    h2 = jax.random.normal(k6, (1, 64, 12, 12), dtype=jnp.float32)
    out3 = evaluator_forward(h1, h2, max_channel_block=16)
    jax.block_until_ready(out3)
    ref3 = reference(h1, h2)
    assert out3.shape == (1, 12, 12)
    assert out3.dtype == jnp.float32
    assert jnp.allclose(out3, ref3, atol=1e-5, rtol=1e-5)

    print("KERNEL_OK")
</pallas_src>

<mosaic_0001>
module attributes {stable_mosaic.version = 11 : i64} {
  func.func @_cosine_fused_kernel(%arg0: i32, %arg1: i32, %arg2: memref<1x4x256xf32, #tpu.memory_space<vmem>>, %arg3: memref<1x4x256xf32, #tpu.memory_space<vmem>>, %arg4: memref<1x1x256xf32, #tpu.memory_space<vmem>>) attributes {dimension_semantics = [#tpu.dimension_semantics<parallel>, #tpu.dimension_semantics<parallel>], iteration_bounds = array<i64: 2, 1>, scalar_prefetch = 0 : i64, scratch_operands = 0 : i64, tpu.core_type = #tpu.core_type<tc>, window_params = [{transform_indices = @transform_0, window_bounds = array<i64: 1, 4, 256>}, {transform_indices = @transform_1, window_bounds = array<i64: 1, 4, 256>}, {transform_indices = @transform_2, window_bounds = array<i64: 1, 1, 256>}]} {
    %c0 = arith.constant 0 : index
    %c0_0 = arith.constant 0 : index
    %c0_1 = arith.constant 0 : index
    %0 = vector.load %arg2[%c0, %c0_0, %c0_1] : memref<1x4x256xf32, #tpu.memory_space<vmem>>, vector<1x4x256xf32>
    %c0_2 = arith.constant 0 : index
    %c0_3 = arith.constant 0 : index
    %c0_4 = arith.constant 0 : index
    %1 = vector.load %arg3[%c0_2, %c0_3, %c0_4] : memref<1x4x256xf32, #tpu.memory_space<vmem>>, vector<1x4x256xf32>
    %2 = arith.mulf %0, %1 : vector<1x4x256xf32>
    %cst = arith.constant dense<0.000000e+00> : vector<1x256xf32>
    %3 = vector.multi_reduction <add>, %2, %cst [1] : vector<1x4x256xf32> to vector<1x256xf32>
    %4 = arith.mulf %0, %0 : vector<1x4x256xf32>
    %cst_5 = arith.constant dense<0.000000e+00> : vector<1x256xf32>
    %5 = vector.multi_reduction <add>, %4, %cst_5 [1] : vector<1x4x256xf32> to vector<1x256xf32>
    %6 = arith.mulf %1, %1 : vector<1x4x256xf32>
    %cst_6 = arith.constant dense<0.000000e+00> : vector<1x256xf32>
    %7 = vector.multi_reduction <add>, %6, %cst_6 [1] : vector<1x4x256xf32> to vector<1x256xf32>
    %cst_7 = arith.constant 1.000000e-16 : f32
    %8 = vector.broadcast %cst_7 : f32 to vector<1x256xf32>
    %9 = arith.maximumf %5, %8 : vector<1x256xf32>
    %10 = math.rsqrt %9 : vector<1x256xf32>
    %cst_8 = arith.constant 1.000000e-16 : f32
    %11 = vector.broadcast %cst_8 : f32 to vector<1x256xf32>
    %12 = arith.maximumf %7, %11 : vector<1x256xf32>
    %13 = math.rsqrt %12 : vector<1x256xf32>
    %14 = arith.mulf %3, %10 : vector<1x256xf32>
    %15 = arith.mulf %14, %13 : vector<1x256xf32>
    %c0_9 = arith.constant 0 : index
    %c0_10 = arith.constant 0 : index
    %c0_11 = arith.constant 0 : index
    %16 = vector.load %arg4[%c0_9, %c0_10, %c0_11] : memref<1x1x256xf32, #tpu.memory_space<vmem>>, vector<1x1x256xf32>
    %17 = vector.shape_cast %16 : vector<1x1x256xf32> to vector<1x256xf32>
    %18 = vector.shape_cast %15 : vector<1x256xf32> to vector<1x1x256xf32>
    tpu.vector_store %arg4[%c0_9, %c0_10, %c0_11], %18 {strides = array<i32>} : memref<1x1x256xf32, #tpu.memory_space<vmem>>, vector<1x1x256xf32>,
    return
  }
  func.func @transform_0(%arg0: i32, %arg1: i32) -> (i32, i32, i32) {
    %c0_i32 = arith.constant 0 : i32
    %c0_i32_0 = arith.constant 0 : i32
    return %arg0, %c0_i32, %arg1 : i32, i32, i32
  }
  func.func @transform_1(%arg0: i32, %arg1: i32) -> (i32, i32, i32) {
    %c0_i32 = arith.constant 0 : i32
    %c0_i32_0 = arith.constant 0 : i32
    return %arg0, %c0_i32, %arg1 : i32, i32, i32
  }
  func.func @transform_2(%arg0: i32, %arg1: i32) -> (i32, i32, i32) {
    %c0_i32 = arith.constant 0 : i32
    %c0_i32_0 = arith.constant 0 : i32
    return %arg0, %c0_i32, %arg1 : i32, i32, i32
  }
}

</mosaic_0001>

<llo_original>
// kernel: tpu_custom_call.1
$region0: #{tpu_custom_call.1}
  #allocation0 [shape = 'u32[]', space=smem, size = 0x4, offset = 0x4, fixed_abs, tag = 'smem constant byte address 0x4 - core index']
  #allocation1 [shape = 'u32[72,128]{1,0:T(1,128)}', space=vmem, size = 0x9000, scoped, tag = 'internal scratch']
  %s0 = inlined_call_operand.hbm [shape: f32[2,4,256], index: 0, kind: input, shape index: {}]
  %s1 = inlined_call_operand.hbm [shape: f32[2,4,256], index: 1, kind: input, shape index: {}]
  %s2 = inlined_call_operand.hbm [shape: f32[2,1,256], index: 2, kind: output, shape index: {}]
  %s3 = sld [smem:[#allocation0]]
  $region49: #{tpu_custom_call.1} parent=0
    _
  %s5 = ssub.s32 1, %s3
  %s6 = scalar_select 0, %s5, %s3
  $region1: #{tpu_custom_call.1} parent=0
    #allocation2 [shape = 'u8[8192]{0}', space=vmem, size = 0x2000, scoped, tag = 'input window, operand 0']
    #allocation3 [shape = 's32[2]{0}', space=sflag, size = 0x8, scoped, tag = 'scoped memory for tpu_custom_call.1']
    #allocation4 [shape = 's32[2]{0}', space=sflag, size = 0x8, scoped, tag = 'scoped memory for tpu_custom_call.1']
    #allocation5 [shape = 'u8[8192]{0}', space=vmem, size = 0x2000, scoped, tag = 'input window, operand 1']
    #allocation6 [shape = 's32[2]{0}', space=sflag, size = 0x8, scoped, tag = 'scoped memory for tpu_custom_call.1']
    #allocation7 [shape = 'u8[2048]{0}', space=vmem, size = 0x800, scoped, tag = 'output window, operand 0']
    %7 = vsyncpa [#allocation3], 0
    %s8 = scalar_lea.sflag [#allocation3], 1
    %9 = vsyncpa %s8, 0
    %10 = vsyncpa [#allocation6], 0
    %s11 = scalar_lea.sflag [#allocation6], 1
    %12 = vsyncpa %s11, 0
    %13 = vsyncpa [#allocation4], 0
    %s14 = scalar_lea.sflag [#allocation4], 1
    %15 = vsyncpa %s14, 0
    loop: start=0, step=1, limit=4
    $region2: #{tpu_custom_call.1} parent=1 // loop_pre_header
      _
    $region3: #{tpu_custom_call.1} parent=1 // loop_header
      %s17 = sphi 0, %s21
      %p18 = scmp.ge.s32.totalorder %s17, 4
      %s24 = sphi 0, %s36
      %s25 = sphi 0, %s32
      %s26 = sphi 0, %s24
      %s27 = sphi 0, %s25
      %s28 = sphi 0, %s26
      %s29 = sphi 0, %s27
      %s41 = sphi 0, %s43
      %s44 = sphi 0, %s41
      %s45 = sphi 0, %s44
      %s61 = sphi 0, %s45
      %s69 = sphi 0, %s71
      %s72 = sphi 0, %s69
      %s73 = sphi 0, %s72
      %s89 = sphi 0, %s73
      %s97 = sphi 0, %s99
      %s100 = sphi 0, %s97
      %s101 = sphi 0, %s100
      %s117 = sphi 0, %s101
    $region4: #{tpu_custom_call.1} parent=1 // loop_header_branch
      %20 = sbr.rel (%p18) target = $region8
    $region5: #{tpu_custom_call.1} parent=1 // loop_body
      %s22 = ssub.s32 %s17, 1
      %s23 = ssub.s32 %s17, 2
      %s30 = sadd.s32 1, %s25
      %p31 = scmp.ge.s32.totalorder %s30, 1
      %s32 = scalar_select %p31, 0, %s30
      %s33 = sadd.s32 1, %s24
      %s34 = scalar_select %p31, %s33, %s24
      %p35 = scmp.ge.s32.totalorder %s34, 2
      %s36 = scalar_select %p35, 0, %s34
      %s37 = ssub.s32 %s24, %s36
      %s38 = ssub.s32 %s25, %s32
      %s39 = sor.u32 %s37, %s38
      %p40 = scmp.eq.s32.totalorder %s39, 0
      %s42 = sadd.s32 %s41, 1
      %s43 = scalar_select %p40, %s41, %s42
      %p46 = pneg %p40
      %p47 = scmp.eq.s32.totalorder %s17, 1
      %p48 = por %p46, %p47
      %p49 = scmp.ne.s32.totalorder %s41, %s44
      %p50 = scmp.eq.s32.totalorder %s17, 0
      %p51 = por %p49, %p50
      %p52 = scmp.ne.s32.totalorder %s41, %s44
      %p53 = scmp.eq.s32.totalorder %s22, 1
      %p54 = por %p52, %p53
      %p55 = scmp.ne.s32.totalorder %s44, %s45
      %p56 = scmp.eq.s32.totalorder %s22, 0
      %p57 = por %p55, %p56
      %p58 = scmp.ne.s32.totalorder %s44, %s45
      %p59 = scmp.eq.s32.totalorder %s23, 1
      %p60 = por %p58, %p59
      %p62 = scmp.ne.s32.totalorder %s45, %s61
      %p63 = scmp.eq.s32.totalorder %s23, 0
      %p64 = por %p62, %p63
      %s65 = ssub.s32 %s24, %s36
      %s66 = ssub.s32 %s25, %s32
      %s67 = sor.u32 %s65, %s66
      %p68 = scmp.eq.s32.totalorder %s67, 0
      %s70 = sadd.s32 %s69, 1
      %s71 = scalar_select %p68, %s69, %s70
      %p74 = pneg %p68
      %p75 = scmp.eq.s32.totalorder %s17, 1
      %p76 = por %p74, %p75
      %p77 = scmp.ne.s32.totalorder %s69, %s72
      %p78 = scmp.eq.s32.totalorder %s17, 0
      %p79 = por %p77, %p78
      %p80 = scmp.ne.s32.totalorder %s69, %s72
      %p81 = scmp.eq.s32.totalorder %s22, 1
      %p82 = por %p80, %p81
      %p83 = scmp.ne.s32.totalorder %s72, %s73
      %p84 = scmp.eq.s32.totalorder %s22, 0
      %p85 = por %p83, %p84
      %p86 = scmp.ne.s32.totalorder %s72, %s73
      %p87 = scmp.eq.s32.totalorder %s23, 1
      %p88 = por %p86, %p87
      %p90 = scmp.ne.s32.totalorder %s73, %s89
      %p91 = scmp.eq.s32.totalorder %s23, 0
      %p92 = por %p90, %p91
      %s93 = ssub.s32 %s24, %s36
      %s94 = ssub.s32 %s25, %s32
      %s95 = sor.u32 %s93, %s94
      %p96 = scmp.eq.s32.totalorder %s95, 0
      %s98 = sadd.s32 %s97, 1
      %s99 = scalar_select %p96, %s97, %s98
      %p102 = pneg %p96
      %p103 = scmp.eq.s32.totalorder %s17, 1
      %p104 = por %p102, %p103
      %p105 = scmp.ne.s32.totalorder %s97, %s100
      %p106 = scmp.eq.s32.totalorder %s17, 0
      %p107 = por %p105, %p106
      %p108 = scmp.ne.s32.totalorder %s97, %s100
      %p109 = scmp.eq.s32.totalorder %s22, 1
      %p110 = por %p108, %p109
      %p111 = scmp.ne.s32.totalorder %s100, %s101
      %p112 = scmp.eq.s32.totalorder %s22, 0
      %p113 = por %p111, %p112
      %p114 = scmp.ne.s32.totalorder %s100, %s101
      %p115 = scmp.eq.s32.totalorder %s23, 1
      %p116 = por %p114, %p115
      %p118 = scmp.ne.s32.totalorder %s101, %s117
      %p119 = scmp.eq.s32.totalorder %s23, 0
      %p120 = por %p118, %p119
      %p121 = scmp.le.s32.totalorder 1, %s17
      %p122 = scmp.lt.s32.totalorder %s17, 3
      %p123 = pnand %p121, %p122
      %p124 = pneg %p123
      // Predicated region
      $region9: #{tpu_custom_call.1} parent=5 // pred_check
        _
      $region10: #{tpu_custom_call.1} parent=5 // pred_check_branch
        %126 = sbr.rel (%p123) target = $region12
      $region11: #{tpu_custom_call.1} parent=5 // pred_region
        %s127 = ssub.s32 %s17, 1
      $region12: #{tpu_custom_call.1} parent=5 // pred_fallthru
        _
      %p128 = scmp.lt.s32.totalorder %s17, 2
      // Predicated region
      $region13: #{tpu_custom_call.1} parent=5 // pred_check
        %p129 = pneg %p128
      $region14: #{tpu_custom_call.1} parent=5 // pred_check_branch
        %131 = sbr.rel (%p129) target = $region16
      $region15: #{tpu_custom_call.1} parent=5 // pred_region
        // Predicated region
        $region17: #{tpu_custom_call.1} parent=15 // pred_check
          %p132 = pneg %p51
        $region18: #{tpu_custom_call.1} parent=15 // pred_check_branch
          %134 = sbr.rel (%p132) target = $region20
        $region19: #{tpu_custom_call.1} parent=15 // pred_region
          %s135 = sand.u32 %s41, 1
          %s136 = scalar_lea.sflag [#allocation3], %s135
          %s137 = sand.u32 %s41, 1
          %s138 = smul.addr %s137, 8
          %s139 = scalar_lea.vmem [#allocation2], %s138
          %s140 = smul.u32 2, %s25
          %142 = vsyncadd %s136, 0
          %s143 = smul.addr %s24, 2
          %s144 = sadd.s32 %s140, %s143
          %s145 = smul.addr %s144, 4
          %s146 = scalar_lea.hbm %s0, %s145
          %s148 = sshll.u32 %s146, 4
          %s149 = int_to_ptr.hbm [resolvable:$true] %s148
          %s150 = sshll.u32 %s139, 4
          %s151 = int_to_ptr.vmem [resolvable:$true] %s150
          %153 = dma.hbm_to_vmem [thread:$0]  %s149, 128, %s151, %s136
        $region20: #{tpu_custom_call.1} parent=15 // pred_fallthru
          _
        // Predicated region
        $region21: #{tpu_custom_call.1} parent=15 // pred_check
          %p154 = pneg %p79
        $region22: #{tpu_custom_call.1} parent=15 // pred_check_branch
          %156 = sbr.rel (%p154) target = $region24
        $region23: #{tpu_custom_call.1} parent=15 // pred_region
          %s157 = sand.u32 %s69, 1
          %s158 = scalar_lea.sflag [#allocation6], %s157
          %s159 = sand.u32 %s69, 1
          %s160 = smul.addr %s159, 8
          %s161 = scalar_lea.vmem [#allocation5], %s160
          %s162 = smul.u32 2, %s25
          %164 = vsyncadd %s158, 0
          %s165 = smul.addr %s24, 2
          %s166 = sadd.s32 %s162, %s165
          %s167 = smul.addr %s166, 4
          %s168 = scalar_lea.hbm %s1, %s167
          %s170 = sshll.u32 %s168, 4
          %s171 = int_to_ptr.hbm [resolvable:$true] %s170
          %s172 = sshll.u32 %s161, 4
          %s173 = int_to_ptr.vmem [resolvable:$true] %s172
          %175 = dma.hbm_to_vmem [thread:$0]  %s171, 128, %s173, %s158
        $region24: #{tpu_custom_call.1} parent=15 // pred_fallthru
          _
      $region16: #{tpu_custom_call.1} parent=5 // pred_fallthru
        _
      %p176 = scmp.le.s32.totalorder 1, %s17
      %p177 = scmp.lt.s32.totalorder %s17, 3
      %p178 = pnand %p176, %p177
      %p179 = pneg %p178
      // Predicated region
      $region25: #{tpu_custom_call.1} parent=5 // pred_check
        _
      $region26: #{tpu_custom_call.1} parent=5 // pred_check_branch
        %181 = sbr.rel (%p178) target = $region28
      $region27: #{tpu_custom_call.1} parent=5 // pred_region
        %s182 = ssub.s32 %s17, 1
        %s183 = sand.u32 %s44, 1
        %s184 = scalar_lea.sflag [#allocation3], %s183
        %s185 = sand.u32 %s44, 1
        %s186 = smul.addr %s185, 8
        %s187 = scalar_lea.vmem [#allocation2], %s186
        // Predicated region
        $region29: #{tpu_custom_call.1} parent=27 // pred_check
          %p188 = pneg %p57
        $region30: #{tpu_custom_call.1} parent=27 // pred_check_branch
          %190 = sbr.rel (%p188) target = $region32
        $region31: #{tpu_custom_call.1} parent=27 // pred_region
          %192 = dma.done %s184, 128
        $region32: #{tpu_custom_call.1} parent=27 // pred_fallthru
          _
        %s193 = sand.u32 %s72, 1
        %s194 = scalar_lea.sflag [#allocation6], %s193
        %s195 = sand.u32 %s72, 1
        %s196 = smul.addr %s195, 8
        %s197 = scalar_lea.vmem [#allocation5], %s196
        // Predicated region
        $region33: #{tpu_custom_call.1} parent=27 // pred_check
          %p198 = pneg %p85
        $region34: #{tpu_custom_call.1} parent=27 // pred_check_branch
          %200 = sbr.rel (%p198) target = $region36
        $region35: #{tpu_custom_call.1} parent=27 // pred_region
          %202 = dma.done %s194, 128
        $region36: #{tpu_custom_call.1} parent=27 // pred_fallthru
          _
        %s203 = sand.u32 %s44, 1
        %s204 = scalar_lea.sflag [#allocation3], %s203
        %s205 = sand.u32 %s44, 1
        %s206 = smul.addr %s205, 8
        %s207 = scalar_lea.vmem [#allocation2], %s206
        %p208 = pneg %p57
        %p209 = pneg %p54
        %s210 = sand.u32 %s72, 1
        %s211 = scalar_lea.sflag [#allocation6], %s210
        %s212 = sand.u32 %s72, 1
        %s213 = smul.addr %s212, 8
        %s214 = scalar_lea.vmem [#allocation5], %s213
        %p215 = pneg %p85
        %p216 = pneg %p82
        %p217 = pneg %p113
        %p218 = pneg %p110
        %s219 = sand.u32 %s100, 1
        %s220 = scalar_lea.sflag [#allocation4], %s219
        %s221 = sand.u32 %s100, 1
        %s222 = smul.addr %s221, 2
        %s223 = scalar_lea.vmem [#allocation7], %s222
        %s224 = smul.u32 2, %s27
        %s225 = smul.u32 2, %s27
        %s226 = smul.u32 2, %s27
        %v227 = vld [vmem:[%s187] sm:$0xff]
        %v228 = vld [vmem:[%s197] sm:$0xff]
        %v229 = vmul.f32 %v227, %v228
        %231 = vst [vmem:[#allocation1] ss:$2 sm:$0xff] %v229
        %v232 = vld.sshfl [vmem:[#allocation1] sm:$0xff pattern:$0x75316420]
        %v233 = vld.sshfl [vmem:[#allocation1 + $0x8] sm:$0xff pattern:$0x75316420]
        %vm236 = vcmask 1043456
        %v237 = vsel %vm236, %v232, 0.0
        %v238 = vrot.slane %v237, 4
        %v239 = vadd.f32 %v237, %v238
        %v240 = vrot.slane %v239, 2
        %v241 = vadd.f32 %v239, %v240
        %v242 = vrot.slane %v241, 1
        %v243 = vadd.f32 %v241, %v242
        %v244 = vsel %vm236, %v233, 0.0
        %v245 = vrot.slane %v244, 4
        %v246 = vadd.f32 %v244, %v245
        %v247 = vrot.slane %v246, 2
        %v248 = vadd.f32 %v246, %v247
        %v249 = vrot.slane %v248, 1
        %v250 = vadd.f32 %v248, %v249
        %v251 = vmul.f32 %v227, %v227
        %253 = vst [vmem:[#allocation1] ss:$2 sm:$0xff] %v251
        %v254 = vld.sshfl [vmem:[#allocation1] sm:$0xff pattern:$0x75316420]
        %v255 = vld.sshfl [vmem:[#allocation1 + $0x8] sm:$0xff pattern:$0x75316420]
        %v258 = vsel %vm236, %v254, 0.0
        %v259 = vrot.slane %v258, 4
        %v260 = vadd.f32 %v258, %v259
        %v261 = vrot.slane %v260, 2
        %v262 = vadd.f32 %v260, %v261
        %v263 = vrot.slane %v262, 1
        %v264 = vadd.f32 %v262, %v263
        %v265 = vsel %vm236, %v255, 0.0
        %v266 = vrot.slane %v265, 4
        %v267 = vadd.f32 %v265, %v266
        %v268 = vrot.slane %v267, 2
        %v269 = vadd.f32 %v267, %v268
        %v270 = vrot.slane %v269, 1
        %v271 = vadd.f32 %v269, %v270
        %v272 = vmul.f32 %v228, %v228
        %274 = vst [vmem:[#allocation1] ss:$2 sm:$0xff] %v272
        %v275 = vld.sshfl [vmem:[#allocation1] sm:$0xff pattern:$0x75316420]
        %v276 = vld.sshfl [vmem:[#allocation1 + $0x8] sm:$0xff pattern:$0x75316420]
        %v279 = vsel %vm236, %v275, 0.0
        %v280 = vrot.slane %v279, 4
        %v281 = vadd.f32 %v279, %v280
        %v282 = vrot.slane %v281, 2
        %v283 = vadd.f32 %v281, %v282
        %v284 = vrot.slane %v283, 1
        %v285 = vadd.f32 %v283, %v284
        %v286 = vsel %vm236, %v276, 0.0
        %v287 = vrot.slane %v286, 4
        %v288 = vadd.f32 %v286, %v287
        %v289 = vrot.slane %v288, 2
        %v290 = vadd.f32 %v288, %v289
        %v291 = vrot.slane %v290, 1
        %v292 = vadd.f32 %v290, %v291
        %v293 = vmax.f32 %v264, 1e-16
        %v294 = vmax.f32 %v271, 1e-16
        %v295 = vrsqrt.pop %v293
        %v296 = vmul.f32 %v295, %v293
        %v297 = vmul.f32 %v296, %v295
        %v298 = vmul.f32 0.5, %v297
        %v299 = vsub.f32 1.5, %v298
        %v300 = vmul.f32 %v295, %v299
        %vm301 = vweird.f32 %v293
        %vm302 = vweird.f32 %v295
        %vm303 = vmor %vm301, %vm302
        %v304 = vsel %vm303, %v295, %v300
        %v305 = vrsqrt.pop %v294
        %v306 = vmul.f32 %v305, %v294
        %v307 = vmul.f32 %v306, %v305
        %v308 = vmul.f32 0.5, %v307
        %v309 = vsub.f32 1.5, %v308
        %v310 = vmul.f32 %v305, %v309
        %vm311 = vweird.f32 %v294
        %vm312 = vweird.f32 %v305
        %vm313 = vmor %vm311, %vm312
        %v314 = vsel %vm313, %v305, %v310
        %v315 = vmax.f32 %v285, 1e-16
        %v316 = vmax.f32 %v292, 1e-16
        %v317 = vrsqrt.pop %v315
        %v318 = vmul.f32 %v317, %v315
        %v319 = vmul.f32 %v318, %v317
        %v320 = vmul.f32 0.5, %v319
        %v321 = vsub.f32 1.5, %v320
        %v322 = vmul.f32 %v317, %v321
        %vm323 = vweird.f32 %v315
        %vm324 = vweird.f32 %v317
        %vm325 = vmor %vm323, %vm324
        %v326 = vsel %vm325, %v317, %v322
        %v327 = vrsqrt.pop %v316
        %v328 = vmul.f32 %v327, %v316
        %v329 = vmul.f32 %v328, %v327
        %v330 = vmul.f32 0.5, %v329
        %v331 = vsub.f32 1.5, %v330
        %v332 = vmul.f32 %v327, %v331
        %vm333 = vweird.f32 %v316
        %vm334 = vweird.f32 %v327
        %vm335 = vmor %vm333, %vm334
        %v336 = vsel %vm335, %v327, %v332
        %v337 = vmul.f32 %v243, %v304
        %v338 = vmul.f32 %v250, %v314
        %v339 = vmul.f32 %v337, %v326
        %v340 = vmul.f32 %v338, %v336
        %v343 = vrot.slane %v340, 7
        %vm344 = vcmask 1040384
        %v345 = vsel %vm344, %v339, %v343
        %v347 = vlaneseq
        %vm348 = vcmp.ge.s32.totalorder %v347, 0
        %vm349 = vcmp.lt.s32.totalorder %v347, 256
        %vm350 = vmand %vm348, %vm349
        %351 = vst.msk [vmem:[%s223] sm:$0x3] %vm350, %v345
        %s352 = sand.u32 %s100, 1
        %s353 = scalar_lea.sflag [#allocation4], %s352
        %s354 = sand.u32 %s100, 1
        %s355 = smul.addr %s354, 2
        %s356 = scalar_lea.vmem [#allocation7], %s355
        // Predicated region
        $region37: #{tpu_custom_call.1} parent=27 // pred_check
          %p357 = pneg %p110
        $region38: #{tpu_custom_call.1} parent=27 // pred_check_branch
          %359 = sbr.rel (%p357) target = $region40
        $region39: #{tpu_custom_call.1} parent=27 // pred_region
          %s360 = smul.u32 2, %s27
          %362 = vsyncadd %s353, 0
          %s363 = smul.addr %s26, 2
          %s364 = sadd.s32 %s360, %s363
          %s365 = scalar_lea.hbm %s2, %s364
          %s367 = sshll.u32 %s356, 4
          %s368 = int_to_ptr.vmem [resolvable:$true] %s367
          %s369 = sshll.u32 %s365, 4
          %s370 = int_to_ptr.hbm [resolvable:$true] %s369
          %372 = dma.vmem_to_hbm [thread:$0]  %s368, 32, %s370, %s353
        $region40: #{tpu_custom_call.1} parent=27 // pred_fallthru
          _
      $region28: #{tpu_custom_call.1} parent=5 // pred_fallthru
        _
      %p373 = scmp.le.s32.totalorder 2, %s17
      // Predicated region
      $region41: #{tpu_custom_call.1} parent=5 // pred_check
        %p374 = pneg %p373
      $region42: #{tpu_custom_call.1} parent=5 // pred_check_branch
        %376 = sbr.rel (%p374) target = $region44
      $region43: #{tpu_custom_call.1} parent=5 // pred_region
        %s377 = ssub.s32 %s17, 2
        // Predicated region
        $region45: #{tpu_custom_call.1} parent=43 // pred_check
          %p378 = pneg %p116
        $region46: #{tpu_custom_call.1} parent=43 // pred_check_branch
          %380 = sbr.rel (%p378) target = $region48
        $region47: #{tpu_custom_call.1} parent=43 // pred_region
          %s381 = sand.u32 %s101, 1
          %s382 = scalar_lea.sflag [#allocation4], %s381
          %s383 = sand.u32 %s101, 1
          %s384 = smul.addr %s383, 2
          %s385 = scalar_lea.vmem [#allocation7], %s384
          %387 = dma.done %s382, 32
        $region48: #{tpu_custom_call.1} parent=43 // pred_fallthru
          _
      $region44: #{tpu_custom_call.1} parent=5 // pred_fallthru
        _
    $region6: #{tpu_custom_call.1} parent=1 // loop_footer
      %s21 = sadd.s32 1, %s17
    $region7: #{tpu_custom_call.1} parent=1 // loop_footer_branch
      %16 = sbr.rel target = $region3
    $region8: #{tpu_custom_call.1} parent=1 // loop_exit
      _
    %388 = vsyncpa [#allocation3], 1
    %s389 = scalar_lea.sflag [#allocation3], 1
    %390 = vsyncpa %s389, 1
    %391 = vsyncpa [#allocation6], 1
    %s392 = scalar_lea.sflag [#allocation6], 1
    %393 = vsyncpa %s392, 1
    %394 = vsyncpa [#allocation4], 1
    %s395 = scalar_lea.sflag [#allocation4], 1
    %396 = vsyncpa %s395, 1

</llo_original>
